<compile_context>
chip_gen: v5e
topology: v5e:2x2
jax: 0.10.0
libtpu: 0.0.40
codegen_flags: <defaults>
</compile_context>

<pallas_src>
import jax
import jax.numpy as jnp
from jax import lax
from jax.experimental import pallas as pl
from jax.experimental.pallas import tpu as pltpu


_MXU_CONV_MIN_C = 32   # below this, the MXU is <1% utilized -> use VPU FMAs instead


# ----------------------------- Pallas kernel ------------------------------- #

def _cfg_denoiser_kernel(sigma_ref, x_ref, w_ref, bias_ref, o_ref):
    """Fused synthetic-inner-model + (pre-folded) CFG combine.

    sigma_ref: (B,)            per-sample sigma (SMEM scalars)
    x_ref    : (spb*C, HW_t)   rows = [sample b0 ch0..C-1, sample b1 ch0..C-1, ...]
    w_ref    : (C, C)          channel-mixing weight (1x1 conv)
    bias_ref : (spb*C, 1)      per-row effective bias = bu + (bc - bu)*cond_scale
    o_ref    : (spb*C, HW_t)   CFG-combined output tile
    """
    C = w_ref.shape[0]
    spb = x_ref.shape[0] // C          # samples per block (static)
    bstep = pl.program_id(0)           # batch-block index (HW axis is program_id(1))

    w = w_ref[...]                     # (C, C)

    for b in range(spb):               # static unroll over samples in this block
        s = sigma_ref[bstep * spb + b]             # scalar sigma (SMEM)
        s2 = s * s
        c_skip = s2 / (s2 + 1.0)
        c_in = lax.rsqrt(s2 + 1.0)

        xb = x_ref[b * C:(b + 1) * C, :]           # (C, HW_t)
        w_s = c_in * w                             # hoisted: one tiny (C,C) scale

        if C >= _MXU_CONV_MIN_C:
            # Real latent sizes: contraction on the MXU (vector-extended slot).
            yb = jnp.dot(w_s, xb, preferred_element_type=jnp.float32)
        else:
            # Tiny C: C unrolled VPU broadcast-FMAs, no MXU pass.
            yb = w_s[:, 0:1] * xb[0:1, :]
            for c in range(1, C):
                yb = yb + w_s[:, c:c + 1] * xb[c:c + 1, :]

        # CFG combine already folded into bias_ref in the wrapper; write directly
        # into this sample's output rows (no concatenate).
        o_ref[b * C:(b + 1) * C, :] = c_skip * xb + yb + bias_ref[b * C:(b + 1) * C, :]


# ------------------------------ tiling helpers ------------------------------ #

def _pick_spb(B, C):
    """Smallest samples-per-block keeping the row-block a multiple of 8 sublanes."""
    for spb in range(1, B + 1):
        if B % spb == 0 and (spb * C) % 8 == 0:
            return spb
    return B                           # fallback: full-array block (always legal)


def _pick_hw_tile(HW, rows, batch_blocks, target_bytes=4 << 20):
    """Largest multiple-of-128 divisor of HW under a per-buffer VMEM budget,
    nudged down if needed so the total grid has >= 2 parallel steps (v7x 2 TCs)."""
    if HW % 128 != 0:
        return HW                      # full-array block along HW (legal)
    cands = [t for t in range(128, HW + 1, 128) if HW % t == 0]
    fitting = [t for t in cands if rows * t * 4 <= target_bytes]
    tile = max(fitting) if fitting else 128
    if batch_blocks * (HW // tile) < 2 and HW // 128 >= 2:
        smaller = [t for t in cands if HW // t >= 2]
        if smaller:
            tile = max(smaller)
    return tile


# ------------------------------ wrapper ------------------------------------ #

def cfg_denoiser_forward(x, sigma, uncond, cond, cond_scale, w, wc):
    """Reproduces CFGDenoiser.forward without materializing the doubled batch."""
    B, C, H, W_sp = x.shape
    HW = H * W_sp

    spb = _pick_spb(B, C)
    rows = spb * C
    batch_blocks = B // spb
    hw_tile = _pick_hw_tile(HW, rows, batch_blocks)
    grid = (batch_blocks, HW // hw_tile)

    x_rows = x.reshape(B * C, HW).astype(jnp.float32)                  # (B*C, HW)

    # Tiny conditioning projections + the CFG combine, folded into ONE effective
    # per-row bias (valid because the synthetic inner model is affine in cond):
    #   out = base + bu + (bc - bu) * cond_scale
    wc_t = wc.T.astype(jnp.float32)
    bias_u = uncond.astype(jnp.float32) @ wc_t                          # (B, C)
    bias_c = cond.astype(jnp.float32) @ wc_t                            # (B, C)
    bias_eff = (bias_u + (bias_c - bias_u) * cond_scale).reshape(B * C, 1)

    sigma_f = sigma.astype(jnp.float32)
    w_f = w.astype(jnp.float32)

    # x + out double-buffered plus small extras; cap with headroom under v7x's
    # 64 MiB physical VMEM (also fine on v6e / v5e).
    block_bytes = rows * hw_tile * 4
    vmem_limit = int(min(48 << 20, max(16 << 20, 6 * block_bytes)))

    out = pl.pallas_call(
        _cfg_denoiser_kernel,
        out_shape=jax.ShapeDtypeStruct((B * C, HW), jnp.float32),
        grid=grid,
        in_specs=[
            pl.BlockSpec(memory_space=pltpu.SMEM),                      # sigma (B,)
            pl.BlockSpec((rows, hw_tile), lambda i, j: (i, j)),         # x rows
            pl.BlockSpec((C, C), lambda i, j: (0, 0)),                  # W (tiny)
            pl.BlockSpec((rows, 1), lambda i, j: (i, 0)),               # fused bias
        ],
        out_specs=pl.BlockSpec((rows, hw_tile), lambda i, j: (i, j)),
        compiler_params=pltpu.CompilerParams(
            dimension_semantics=("parallel", "parallel"),
            vmem_limit_bytes=vmem_limit,
        ),
    )(sigma_f, x_rows, w_f, bias_eff)

    return out.reshape(B, C, H, W_sp)


# ------------------------- pure-JAX reference ------------------------------ #
# Literal translation of the PyTorch module (doubled batch, then chunk(2)).

def _inner_model_ref(x_flat, sigma, cond, w, wc):
    s2 = (sigma * sigma)[:, None, None]
    c_skip = s2 / (s2 + 1.0)
    c_in = 1.0 / jnp.sqrt(s2 + 1.0)
    conv = jnp.einsum('oc,bcs->bos', w, x_flat * c_in)
    bias = (cond @ wc.T)[:, :, None]
    return c_skip * x_flat + conv + bias


def cfg_denoiser_ref(x, sigma, uncond, cond, cond_scale, w, wc):
    B, C, H, W = x.shape
    x_flat = x.reshape(B, C, H * W)
    x_in = jnp.concatenate([x_flat, x_flat], axis=0)
    sigma_in = jnp.concatenate([sigma, sigma], axis=0)
    cond_in = jnp.concatenate([uncond, cond], axis=0)
    den = _inner_model_ref(x_in, sigma_in, cond_in, w, wc)
    u, c = den[:B], den[B:]
    return (u + (c - u) * cond_scale).reshape(B, C, H, W)


# --------------------------------- main ------------------------------------ #

if __name__ == "__main__":
    B, C, H, W_sp, D = 2, 4, 16, 16, 8
    key = jax.random.PRNGKey(0)
    kx, ks, ku, kc, kw, kwc = jax.random.split(key, 6)

    x = jax.random.normal(kx, (B, C, H, W_sp), dtype=jnp.float32)
    sigma = jnp.abs(jax.random.normal(ks, (B,), dtype=jnp.float32)) + 0.5
    uncond = jax.random.normal(ku, (B, D), dtype=jnp.float32)
    cond = jax.random.normal(kc, (B, D), dtype=jnp.float32)
    cond_scale = 7.5

    # Deterministic synthetic inner-model parameters (1x1 conv + cond projection).
    w = jax.random.normal(kw, (C, C), dtype=jnp.float32) * 0.3
    wc = jax.random.normal(kwc, (C, D), dtype=jnp.float32) * 0.3

    out = cfg_denoiser_forward(x, sigma, uncond, cond, cond_scale, w, wc)
    out = jax.block_until_ready(out)

    ref = cfg_denoiser_ref(x, sigma, uncond, cond, cond_scale, w, wc)
    assert out.shape == (B, C, H, W_sp)
    assert jnp.allclose(out, ref, atol=1e-4, rtol=1e-4), (
        f"max abs err = {jnp.max(jnp.abs(out - ref))}")

    print("KERNEL_OK")
</pallas_src>

<mosaic_0001>
module attributes {stable_mosaic.version = 11 : i64} {
  func.func @_cfg_denoiser_kernel(%arg0: i32, %arg1: i32, %arg2: memref<2xf32, #tpu.memory_space<smem>>, %arg3: memref<8x128xf32, #tpu.memory_space<vmem>>, %arg4: memref<4x4xf32, #tpu.memory_space<vmem>>, %arg5: memref<8x1xf32, #tpu.memory_space<vmem>>, %arg6: memref<8x128xf32, #tpu.memory_space<vmem>>) attributes {dimension_semantics = [#tpu.dimension_semantics<parallel>, #tpu.dimension_semantics<parallel>], iteration_bounds = array<i64: 1, 2>, scalar_prefetch = 0 : i64, scratch_operands = 0 : i64, tpu.core_type = #tpu.core_type<tc>, window_params = [{transform_indices = @transform_0, window_bounds = array<i64: 2>}, {transform_indices = @transform_1, window_bounds = array<i64: 8, 128>}, {pipeline_mode = #tpu.pipeline_mode<synchronous>, transform_indices = @transform_2, window_bounds = array<i64: 4, 4>}, {transform_indices = @transform_3, window_bounds = array<i64: 8, 1>}, {transform_indices = @transform_4, window_bounds = array<i64: 8, 128>}]} {
    %c0 = arith.constant 0 : index
    %c0_0 = arith.constant 0 : index
    %0 = vector.load %arg4[%c0, %c0_0] : memref<4x4xf32, #tpu.memory_space<vmem>>, vector<4x4xf32>
    %c2_i32 = arith.constant 2 : i32
    %1 = arith.muli %arg0, %c2_i32 : i32
    %c0_i32 = arith.constant 0 : i32
    %2 = arith.addi %1, %c0_i32 : i32
    %3 = arith.index_cast %2 : i32 to index
    %4 = memref.load %arg2[%3] : memref<2xf32, #tpu.memory_space<smem>>
    %5 = arith.mulf %4, %4 : f32
    %cst = arith.constant 1.000000e+00 : f32
    %6 = arith.addf %5, %cst : f32
    %7 = arith.divf %5, %6 : f32
    %cst_1 = arith.constant 1.000000e+00 : f32
    %8 = arith.addf %5, %cst_1 : f32
    %9 = math.rsqrt %8 : f32
    %c0_2 = arith.constant 0 : index
    %c0_3 = arith.constant 0 : index
    %10 = vector.load %arg3[%c0_2, %c0_3] : memref<8x128xf32, #tpu.memory_space<vmem>>, vector<4x128xf32>
    %11 = vector.broadcast %9 : f32 to vector<4x4xf32>
    %12 = arith.mulf %11, %0 : vector<4x4xf32>
    %13 = vector.extract_strided_slice %12 {offsets = [0, 0], sizes = [4, 1], strides = [1, 1]} : vector<4x4xf32> to vector<4x1xf32>
    %14 = vector.extract_strided_slice %10 {offsets = [0, 0], sizes = [1, 128], strides = [1, 1]} : vector<4x128xf32> to vector<1x128xf32>
    %15 = vector.broadcast %13 : vector<4x1xf32> to vector<4x128xf32>
    %16 = vector.broadcast %14 : vector<1x128xf32> to vector<4x128xf32>
    %17 = arith.mulf %15, %16 : vector<4x128xf32>
    %18 = vector.extract_strided_slice %12 {offsets = [0, 1], sizes = [4, 1], strides = [1, 1]} : vector<4x4xf32> to vector<4x1xf32>
    %19 = vector.extract_strided_slice %10 {offsets = [1, 0], sizes = [1, 128], strides = [1, 1]} : vector<4x128xf32> to vector<1x128xf32>
    %20 = vector.broadcast %18 : vector<4x1xf32> to vector<4x128xf32>
    %21 = vector.broadcast %19 : vector<1x128xf32> to vector<4x128xf32>
    %22 = arith.mulf %20, %21 : vector<4x128xf32>
    %23 = arith.addf %17, %22 : vector<4x128xf32>
    %24 = vector.extract_strided_slice %12 {offsets = [0, 2], sizes = [4, 1], strides = [1, 1]} : vector<4x4xf32> to vector<4x1xf32>
    %25 = vector.extract_strided_slice %10 {offsets = [2, 0], sizes = [1, 128], strides = [1, 1]} : vector<4x128xf32> to vector<1x128xf32>
    %26 = vector.broadcast %24 : vector<4x1xf32> to vector<4x128xf32>
    %27 = vector.broadcast %25 : vector<1x128xf32> to vector<4x128xf32>
    %28 = arith.mulf %26, %27 : vector<4x128xf32>
    %29 = arith.addf %23, %28 : vector<4x128xf32>
    %30 = vector.extract_strided_slice %12 {offsets = [0, 3], sizes = [4, 1], strides = [1, 1]} : vector<4x4xf32> to vector<4x1xf32>
    %31 = vector.extract_strided_slice %10 {offsets = [3, 0], sizes = [1, 128], strides = [1, 1]} : vector<4x128xf32> to vector<1x128xf32>
    %32 = vector.broadcast %30 : vector<4x1xf32> to vector<4x128xf32>
    %33 = vector.broadcast %31 : vector<1x128xf32> to vector<4x128xf32>
    %34 = arith.mulf %32, %33 : vector<4x128xf32>
    %35 = arith.addf %29, %34 : vector<4x128xf32>
    %36 = vector.broadcast %7 : f32 to vector<4x128xf32>
    %37 = arith.mulf %36, %10 : vector<4x128xf32>
    %38 = arith.addf %37, %35 : vector<4x128xf32>
    %c0_4 = arith.constant 0 : index
    %c0_5 = arith.constant 0 : index
    %39 = vector.load %arg5[%c0_4, %c0_5] : memref<8x1xf32, #tpu.memory_space<vmem>>, vector<4x1xf32>
    %40 = vector.broadcast %39 : vector<4x1xf32> to vector<4x128xf32>
    %41 = arith.addf %38, %40 : vector<4x128xf32>
    %c0_6 = arith.constant 0 : index
    %c0_7 = arith.constant 0 : index
    %42 = vector.load %arg6[%c0_6, %c0_7] : memref<8x128xf32, #tpu.memory_space<vmem>>, vector<4x128xf32>
    tpu.vector_store %arg6[%c0_6, %c0_7], %41 {strides = array<i32>} : memref<8x128xf32, #tpu.memory_space<vmem>>, vector<4x128xf32>,
    %c2_i32_8 = arith.constant 2 : i32
    %43 = arith.muli %arg0, %c2_i32_8 : i32
    %c1_i32 = arith.constant 1 : i32
    %44 = arith.addi %43, %c1_i32 : i32
    %45 = arith.index_cast %44 : i32 to index
    %46 = memref.load %arg2[%45] : memref<2xf32, #tpu.memory_space<smem>>
    %47 = arith.mulf %46, %46 : f32
    %cst_9 = arith.constant 1.000000e+00 : f32
    %48 = arith.addf %47, %cst_9 : f32
    %49 = arith.divf %47, %48 : f32
    %cst_10 = arith.constant 1.000000e+00 : f32
    %50 = arith.addf %47, %cst_10 : f32
    %51 = math.rsqrt %50 : f32
    %c4 = arith.constant 4 : index
    %c0_11 = arith.constant 0 : index
    %52 = vector.load %arg3[%c4, %c0_11] : memref<8x128xf32, #tpu.memory_space<vmem>>, vector<4x128xf32>
    %53 = vector.broadcast %51 : f32 to vector<4x4xf32>
    %54 = arith.mulf %53, %0 : vector<4x4xf32>
    %55 = vector.extract_strided_slice %54 {offsets = [0, 0], sizes = [4, 1], strides = [1, 1]} : vector<4x4xf32> to vector<4x1xf32>
    %56 = vector.extract_strided_slice %52 {offsets = [0, 0], sizes = [1, 128], strides = [1, 1]} : vector<4x128xf32> to vector<1x128xf32>
    %57 = vector.broadcast %55 : vector<4x1xf32> to vector<4x128xf32>
    %58 = vector.broadcast %56 : vector<1x128xf32> to vector<4x128xf32>
    %59 = arith.mulf %57, %58 : vector<4x128xf32>
    %60 = vector.extract_strided_slice %54 {offsets = [0, 1], sizes = [4, 1], strides = [1, 1]} : vector<4x4xf32> to vector<4x1xf32>
    %61 = vector.extract_strided_slice %52 {offsets = [1, 0], sizes = [1, 128], strides = [1, 1]} : vector<4x128xf32> to vector<1x128xf32>
    %62 = vector.broadcast %60 : vector<4x1xf32> to vector<4x128xf32>
    %63 = vector.broadcast %61 : vector<1x128xf32> to vector<4x128xf32>
    %64 = arith.mulf %62, %63 : vector<4x128xf32>
    %65 = arith.addf %59, %64 : vector<4x128xf32>
    %66 = vector.extract_strided_slice %54 {offsets = [0, 2], sizes = [4, 1], strides = [1, 1]} : vector<4x4xf32> to vector<4x1xf32>
    %67 = vector.extract_strided_slice %52 {offsets = [2, 0], sizes = [1, 128], strides = [1, 1]} : vector<4x128xf32> to vector<1x128xf32>
    %68 = vector.broadcast %66 : vector<4x1xf32> to vector<4x128xf32>
    %69 = vector.broadcast %67 : vector<1x128xf32> to vector<4x128xf32>
    %70 = arith.mulf %68, %69 : vector<4x128xf32>
    %71 = arith.addf %65, %70 : vector<4x128xf32>
    %72 = vector.extract_strided_slice %54 {offsets = [0, 3], sizes = [4, 1], strides = [1, 1]} : vector<4x4xf32> to vector<4x1xf32>
    %73 = vector.extract_strided_slice %52 {offsets = [3, 0], sizes = [1, 128], strides = [1, 1]} : vector<4x128xf32> to vector<1x128xf32>
    %74 = vector.broadcast %72 : vector<4x1xf32> to vector<4x128xf32>
    %75 = vector.broadcast %73 : vector<1x128xf32> to vector<4x128xf32>
    %76 = arith.mulf %74, %75 : vector<4x128xf32>
    %77 = arith.addf %71, %76 : vector<4x128xf32>
    %78 = vector.broadcast %49 : f32 to vector<4x128xf32>
    %79 = arith.mulf %78, %52 : vector<4x128xf32>
    %80 = arith.addf %79, %77 : vector<4x128xf32>
    %c4_12 = arith.constant 4 : index
    %c0_13 = arith.constant 0 : index
    %81 = vector.load %arg5[%c4_12, %c0_13] : memref<8x1xf32, #tpu.memory_space<vmem>>, vector<4x1xf32>
    %82 = vector.broadcast %81 : vector<4x1xf32> to vector<4x128xf32>
    %83 = arith.addf %80, %82 : vector<4x128xf32>
    %c4_14 = arith.constant 4 : index
    %c0_15 = arith.constant 0 : index
    %84 = vector.load %arg6[%c4_14, %c0_15] : memref<8x128xf32, #tpu.memory_space<vmem>>, vector<4x128xf32>
    tpu.vector_store %arg6[%c4_14, %c0_15], %83 {strides = array<i32>} : memref<8x128xf32, #tpu.memory_space<vmem>>, vector<4x128xf32>,
    return
  }
  func.func @transform_0(%arg0: i32, %arg1: i32) -> i32 {
    %c0_i32 = arith.constant 0 : i32
    %c0_i32_0 = arith.constant 0 : i32
    return %c0_i32 : i32
  }
  func.func @transform_1(%arg0: i32, %arg1: i32) -> (i32, i32) {
    %c0_i32 = arith.constant 0 : i32
    return %arg0, %arg1 : i32, i32
  }
  func.func @transform_2(%arg0: i32, %arg1: i32) -> (i32, i32) {
    %c0_i32 = arith.constant 0 : i32
    %c0_i32_0 = arith.constant 0 : i32
    %c0_i32_1 = arith.constant 0 : i32
    return %c0_i32, %c0_i32_0 : i32, i32
  }
  func.func @transform_3(%arg0: i32, %arg1: i32) -> (i32, i32) {
    %c0_i32 = arith.constant 0 : i32
    %c0_i32_0 = arith.constant 0 : i32
    return %arg0, %c0_i32 : i32, i32
  }
  func.func @transform_4(%arg0: i32, %arg1: i32) -> (i32, i32) {
    %c0_i32 = arith.constant 0 : i32
    return %arg0, %arg1 : i32, i32
  }
}

</mosaic_0001>

<llo_original>
// kernel: tpu_custom_call.1
$region0: #{tpu_custom_call.1}
  #allocation0 [shape = 'u32[]', space=smem, size = 0x4, offset = 0x4, fixed_abs, tag = 'smem constant byte address 0x4 - core index']
  #allocation1 [shape = 'u32[72,128]{1,0:T(1,128)}', space=vmem, size = 0x9000, scoped, tag = 'internal scratch']
  %s0 = inlined_call_operand.vmem [shape: f32[2], index: 0, kind: input, shape index: {}]
  %s1 = inlined_call_operand.hbm [shape: f32[8,256], index: 1, kind: input, shape index: {}]
  %s2 = inlined_call_operand.vmem [shape: f32[4,4], index: 2, kind: input, shape index: {}]
  %s3 = inlined_call_operand.vmem [shape: f32[8,1], index: 3, kind: input, shape index: {}]
  %s4 = inlined_call_operand.hbm [shape: f32[8,256], index: 4, kind: output, shape index: {}]
  %s5 = sld [smem:[#allocation0]]
  $region57: #{tpu_custom_call.1} parent=0
    _
  %s7 = ssub.s32 1, %s5
  %s8 = scalar_select 0, %s7, %s5
  $region1: #{tpu_custom_call.1} parent=0
    #allocation2 [shape = 'u8[512]{0}', space=smem, size = 0x200, scoped, tag = 'input window, operand 0, single buffered']
    #allocation3 [shape = 's32[2]{0}', space=sflag, size = 0x8, scoped, tag = 'scoped memory for tpu_custom_call.1']
    #allocation4 [shape = 's32[2]{0}', space=sflag, size = 0x8, scoped, tag = 'scoped memory for tpu_custom_call.1']
    #allocation5 [shape = 's32[2]{0}', space=sflag, size = 0x8, scoped, tag = 'scoped memory for tpu_custom_call.1']
    #allocation6 [shape = 'u8[8192]{0}', space=vmem, size = 0x2000, scoped, tag = 'input window, operand 1']
    #allocation7 [shape = 'u8[8192]{0}', space=vmem, size = 0x2000, scoped, tag = 'output window, operand 0']
    %9 = vsyncpa [#allocation5], 0
    %10 = vsyncpa [#allocation3], 0
    %s11 = scalar_lea.sflag [#allocation3], 1
    %12 = vsyncpa %s11, 0
    %13 = vsyncpa [#allocation4], 0
    %s14 = scalar_lea.sflag [#allocation4], 1
    %15 = vsyncpa %s14, 0
    loop: start=0, step=1, limit=4
    $region2: #{tpu_custom_call.1} parent=1 // loop_pre_header
      _
    $region3: #{tpu_custom_call.1} parent=1 // loop_header
      %s17 = sphi 0, %s21
      %p18 = scmp.ge.s32.totalorder %s17, 4
      %s24 = sphi 0, %s36
      %s25 = sphi 0, %s32
      %s26 = sphi 0, %s24
      %s27 = sphi 0, %s25
      %s28 = sphi 0, %s26
      %s29 = sphi 0, %s27
      %s37 = sphi 0, %s37
      %s39 = sphi 0, %s37
      %s40 = sphi 0, %s39
      %s54 = sphi 0, %s40
      %s62 = sphi 0, %s64
      %s65 = sphi 0, %s62
      %s66 = sphi 0, %s65
      %s82 = sphi 0, %s66
      %s86 = sphi 0, %s86
      %s88 = sphi 0, %s86
      %s89 = sphi 0, %s88
      %s103 = sphi 0, %s89
      %s109 = sphi 0, %s111
      %s112 = sphi 0, %s109
      %s113 = sphi 0, %s112
      %s129 = sphi 0, %s113
      %s137 = sphi 0, %s139
      %s140 = sphi 0, %s137
      %s141 = sphi 0, %s140
      %s157 = sphi 0, %s141
    $region4: #{tpu_custom_call.1} parent=1 // loop_header_branch
      %20 = sbr.rel (%p18) target = $region8
    $region5: #{tpu_custom_call.1} parent=1 // loop_body
      %s22 = ssub.s32 %s17, 1
      %s23 = ssub.s32 %s17, 2
      %s30 = sadd.s32 1, %s25
      %p31 = scmp.ge.s32.totalorder %s30, 2
      %s32 = scalar_select %p31, 0, %s30
      %s33 = sadd.s32 1, %s24
      %s34 = scalar_select %p31, %s33, %s24
      %p35 = scmp.ge.s32.totalorder %s34, 1
      %s36 = scalar_select %p35, 0, %s34
      %s38 = sadd.s32 %s37, 1
      %p41 = scmp.eq.s32.totalorder %s17, 1
      %p42 = scmp.ne.s32.totalorder %s37, %s39
      %p43 = scmp.eq.s32.totalorder %s17, 0
      %p44 = por %p42, %p43
      %p45 = scmp.ne.s32.totalorder %s37, %s39
      %p46 = scmp.eq.s32.totalorder %s22, 1
      %p47 = por %p45, %p46
      %p48 = scmp.ne.s32.totalorder %s39, %s40
      %p49 = scmp.eq.s32.totalorder %s22, 0
      %p50 = por %p48, %p49
      %p51 = scmp.ne.s32.totalorder %s39, %s40
      %p52 = scmp.eq.s32.totalorder %s23, 1
      %p53 = por %p51, %p52
      %p55 = scmp.ne.s32.totalorder %s40, %s54
      %p56 = scmp.eq.s32.totalorder %s23, 0
      %p57 = por %p55, %p56
      %s58 = ssub.s32 %s24, %s36
      %s59 = ssub.s32 %s25, %s32
      %s60 = sor.u32 %s58, %s59
      %p61 = scmp.eq.s32.totalorder %s60, 0
      %s63 = sadd.s32 %s62, 1
      %s64 = scalar_select %p61, %s62, %s63
      %p67 = pneg %p61
      %p68 = scmp.eq.s32.totalorder %s17, 1
      %p69 = por %p67, %p68
      %p70 = scmp.ne.s32.totalorder %s62, %s65
      %p71 = scmp.eq.s32.totalorder %s17, 0
      %p72 = por %p70, %p71
      %p73 = scmp.ne.s32.totalorder %s62, %s65
      %p74 = scmp.eq.s32.totalorder %s22, 1
      %p75 = por %p73, %p74
      %p76 = scmp.ne.s32.totalorder %s65, %s66
      %p77 = scmp.eq.s32.totalorder %s22, 0
      %p78 = por %p76, %p77
      %p79 = scmp.ne.s32.totalorder %s65, %s66
      %p80 = scmp.eq.s32.totalorder %s23, 1
      %p81 = por %p79, %p80
      %p83 = scmp.ne.s32.totalorder %s66, %s82
      %p84 = scmp.eq.s32.totalorder %s23, 0
      %p85 = por %p83, %p84
      %s87 = sadd.s32 %s86, 1
      %p90 = scmp.eq.s32.totalorder %s17, 1
      %p91 = scmp.ne.s32.totalorder %s86, %s88
      %p92 = scmp.eq.s32.totalorder %s17, 0
      %p93 = por %p91, %p92
      %p94 = scmp.ne.s32.totalorder %s86, %s88
      %p95 = scmp.eq.s32.totalorder %s22, 1
      %p96 = por %p94, %p95
      %p97 = scmp.ne.s32.totalorder %s88, %s89
      %p98 = scmp.eq.s32.totalorder %s22, 0
      %p99 = por %p97, %p98
      %p100 = scmp.ne.s32.totalorder %s88, %s89
      %p101 = scmp.eq.s32.totalorder %s23, 1
      %p102 = por %p100, %p101
      %p104 = scmp.ne.s32.totalorder %s89, %s103
      %p105 = scmp.eq.s32.totalorder %s23, 0
      %p106 = por %p104, %p105
      %s107 = ssub.s32 %s24, %s36
      %p108 = scmp.eq.s32.totalorder %s107, 0
      %s110 = sadd.s32 %s109, 1
      %s111 = scalar_select %p108, %s109, %s110
      %p114 = pneg %p108
      %p115 = scmp.eq.s32.totalorder %s17, 1
      %p116 = por %p114, %p115
      %p117 = scmp.ne.s32.totalorder %s109, %s112
      %p118 = scmp.eq.s32.totalorder %s17, 0
      %p119 = por %p117, %p118
      %p120 = scmp.ne.s32.totalorder %s109, %s112
      %p121 = scmp.eq.s32.totalorder %s22, 1
      %p122 = por %p120, %p121
      %p123 = scmp.ne.s32.totalorder %s112, %s113
      %p124 = scmp.eq.s32.totalorder %s22, 0
      %p125 = por %p123, %p124
      %p126 = scmp.ne.s32.totalorder %s112, %s113
      %p127 = scmp.eq.s32.totalorder %s23, 1
      %p128 = por %p126, %p127
      %p130 = scmp.ne.s32.totalorder %s113, %s129
      %p131 = scmp.eq.s32.totalorder %s23, 0
      %p132 = por %p130, %p131
      %s133 = ssub.s32 %s24, %s36
      %s134 = ssub.s32 %s25, %s32
      %s135 = sor.u32 %s133, %s134
      %p136 = scmp.eq.s32.totalorder %s135, 0
      %s138 = sadd.s32 %s137, 1
      %s139 = scalar_select %p136, %s137, %s138
      %p142 = pneg %p136
      %p143 = scmp.eq.s32.totalorder %s17, 1
      %p144 = por %p142, %p143
      %p145 = scmp.ne.s32.totalorder %s137, %s140
      %p146 = scmp.eq.s32.totalorder %s17, 0
      %p147 = por %p145, %p146
      %p148 = scmp.ne.s32.totalorder %s137, %s140
      %p149 = scmp.eq.s32.totalorder %s22, 1
      %p150 = por %p148, %p149
      %p151 = scmp.ne.s32.totalorder %s140, %s141
      %p152 = scmp.eq.s32.totalorder %s22, 0
      %p153 = por %p151, %p152
      %p154 = scmp.ne.s32.totalorder %s140, %s141
      %p155 = scmp.eq.s32.totalorder %s23, 1
      %p156 = por %p154, %p155
      %p158 = scmp.ne.s32.totalorder %s141, %s157
      %p159 = scmp.eq.s32.totalorder %s23, 0
      %p160 = por %p158, %p159
      %p161 = scmp.le.s32.totalorder 1, %s17
      %p162 = scmp.lt.s32.totalorder %s17, 3
      %p163 = pnand %p161, %p162
      %p164 = pneg %p163
      // Predicated region
      $region9: #{tpu_custom_call.1} parent=5 // pred_check
        _
      $region10: #{tpu_custom_call.1} parent=5 // pred_check_branch
        %166 = sbr.rel (%p163) target = $region12
      $region11: #{tpu_custom_call.1} parent=5 // pred_region
        %s167 = ssub.s32 %s17, 1
        // Predicated region
        $region13: #{tpu_custom_call.1} parent=11 // pred_check
          %p168 = pneg %p50
        $region14: #{tpu_custom_call.1} parent=11 // pred_check_branch
          %170 = sbr.rel (%p168) target = $region16
        $region15: #{tpu_custom_call.1} parent=11 // pred_region
          %172 = vsyncadd [#allocation5], 0
          %s174 = sshll.u32 %s0, 4
          %s175 = int_to_ptr.vmem [resolvable:$true] %s174
          %177 = dma.vmem_to_smem %s175, 16, [#allocation2], [#allocation5]
        $region16: #{tpu_custom_call.1} parent=11 // pred_fallthru
          _
        // Predicated region
        $region17: #{tpu_custom_call.1} parent=11 // pred_check
          %p178 = pneg %p99
        $region18: #{tpu_custom_call.1} parent=11 // pred_check_branch
          %180 = sbr.rel (%p178) target = $region20
        $region19: #{tpu_custom_call.1} parent=11 // pred_region
          _
        $region20: #{tpu_custom_call.1} parent=11 // pred_fallthru
          _
        // Predicated region
        $region21: #{tpu_custom_call.1} parent=11 // pred_check
          %p181 = pneg %p125
        $region22: #{tpu_custom_call.1} parent=11 // pred_check_branch
          %183 = sbr.rel (%p181) target = $region24
        $region23: #{tpu_custom_call.1} parent=11 // pred_region
          %p184 = scmp.lt.s32.totalorder %s26, 0
          %s185 = scalar_select %p184, %s26, 0
          %s186 = smul.addr %s185, 8
          %s187 = scalar_lea.vmem %s3, %s186
        $region24: #{tpu_custom_call.1} parent=11 // pred_fallthru
          _
      $region12: #{tpu_custom_call.1} parent=5 // pred_fallthru
        _
      %p188 = scmp.lt.s32.totalorder %s17, 2
      // Predicated region
      $region25: #{tpu_custom_call.1} parent=5 // pred_check
        %p189 = pneg %p188
      $region26: #{tpu_custom_call.1} parent=5 // pred_check_branch
        %191 = sbr.rel (%p189) target = $region28
      $region27: #{tpu_custom_call.1} parent=5 // pred_region
        // Predicated region
        $region29: #{tpu_custom_call.1} parent=27 // pred_check
          %p192 = pneg %p72
        $region30: #{tpu_custom_call.1} parent=27 // pred_check_branch
          %194 = sbr.rel (%p192) target = $region32
        $region31: #{tpu_custom_call.1} parent=27 // pred_region
          %s195 = sand.u32 %s62, 1
          %s196 = scalar_lea.sflag [#allocation3], %s195
          %s197 = sand.u32 %s62, 1
          %s198 = smul.addr %s197, 8
          %s199 = scalar_lea.vmem [#allocation6], %s198
          %201 = vsyncadd %s196, 0
          %s202 = smul.addr %s24, 2
          %s203 = sadd.s32 %s25, %s202
          %s204 = smul.addr %s203, 8
          %s205 = scalar_lea.hbm %s1, %s204
          %s207 = sshll.u32 %s205, 4
          %s208 = int_to_ptr.hbm [resolvable:$true] %s207
          %s209 = sshll.u32 %s199, 4
          %s210 = int_to_ptr.vmem [resolvable:$true] %s209
          %212 = dma.hbm_to_vmem [thread:$0]  %s208, 128, %s210, %s196
        $region32: #{tpu_custom_call.1} parent=27 // pred_fallthru
          _
      $region28: #{tpu_custom_call.1} parent=5 // pred_fallthru
        _
      %p213 = scmp.le.s32.totalorder 1, %s17
      %p214 = scmp.lt.s32.totalorder %s17, 3
      %p215 = pnand %p213, %p214
      %p216 = pneg %p215
      // Predicated region
      $region33: #{tpu_custom_call.1} parent=5 // pred_check
        _
      $region34: #{tpu_custom_call.1} parent=5 // pred_check_branch
        %218 = sbr.rel (%p215) target = $region36
      $region35: #{tpu_custom_call.1} parent=5 // pred_region
        %s219 = ssub.s32 %s17, 1
        // Predicated region
        $region37: #{tpu_custom_call.1} parent=35 // pred_check
          %p220 = pneg %p50
        $region38: #{tpu_custom_call.1} parent=35 // pred_check_branch
          %222 = sbr.rel (%p220) target = $region40
        $region39: #{tpu_custom_call.1} parent=35 // pred_region
          %224 = dma.done [#allocation5], 16
        $region40: #{tpu_custom_call.1} parent=35 // pred_fallthru
          _
        %s225 = sand.u32 %s65, 1
        %s226 = scalar_lea.sflag [#allocation3], %s225
        %s227 = sand.u32 %s65, 1
        %s228 = smul.addr %s227, 8
        %s229 = scalar_lea.vmem [#allocation6], %s228
        // Predicated region
        $region41: #{tpu_custom_call.1} parent=35 // pred_check
          %p230 = pneg %p78
        $region42: #{tpu_custom_call.1} parent=35 // pred_check_branch
          %232 = sbr.rel (%p230) target = $region44
        $region43: #{tpu_custom_call.1} parent=35 // pred_region
          %234 = dma.done %s226, 128
        $region44: #{tpu_custom_call.1} parent=35 // pred_fallthru
          _
        %235 = sfence
        %p236 = pneg %p50
        %p237 = pneg %p47
        %s238 = sand.u32 %s65, 1
        %s239 = scalar_lea.sflag [#allocation3], %s238
        %s240 = sand.u32 %s65, 1
        %s241 = smul.addr %s240, 8
        %s242 = scalar_lea.vmem [#allocation6], %s241
        %p243 = pneg %p78
        %p244 = pneg %p75
        %p245 = pneg %p99
        %p246 = pneg %p96
        %p247 = scmp.lt.s32.totalorder %s26, 0
        %s248 = scalar_select %p247, %s26, 0
        %s249 = smul.addr %s248, 8
        %s250 = scalar_lea.vmem %s3, %s249
        %p251 = pneg %p125
        %p252 = pneg %p122
        %p253 = pneg %p153
        %p254 = pneg %p150
        %s255 = sand.u32 %s140, 1
        %s256 = scalar_lea.sflag [#allocation4], %s255
        %s257 = sand.u32 %s140, 1
        %s258 = smul.addr %s257, 8
        %s259 = scalar_lea.vmem [#allocation7], %s258
        %p260 = scmp.lt.s32.totalorder %s26, 0
        %s261 = scalar_select %p260, %s26, 0
        %s262 = smul.addr %s261, 8
        %s263 = scalar_lea.vmem %s3, %s262
        %v264 = vld [vmem:[%s2] sm:$0xf]
        %s265 = smul.u32 %s26, 2
        %s266 = sld [smem:[#allocation2 + %s265]]
        %s267 = smul.f32 %s266, %s266
        %s268 = sadd.f32 %s267, 1.0
        %v269 = vstv %s268
        %v270 = vrcp.pop %v269
        %v271 = vmul.f32 %v269, %v270
        %v272 = vsub.f32 1.0, %v271
        %v273 = vmul.f32 %v270, %v272
        %v274 = vadd.f32 %v270, %v273
        %vm275 = vweird.f32 %v269
        %vm276 = vweird.f32 %v270
        %vm277 = vmor %vm275, %vm276
        %v278 = vsel %vm277, %v270, %v274
        %v279 = vand.u32 2147483647, %v269
        %vm280 = vcmp.eq.f32.partialorder %v279, 8.507059e+37
        %v281 = vand.u32 %v269, 2147483648
        %v282 = vor.u32 1.1754944e-38, %v281
        %v283 = vsel %vm280, %v282, %v278
        %s284 = vtos %v283
        %s285 = smul.f32 %s267, %s284
        %v286 = vstv %s268
        %v287 = vrsqrt.pop %v286
        %v288 = vmul.f32 %v287, %v286
        %v289 = vmul.f32 %v288, %v287
        %v290 = vmul.f32 0.5, %v289
        %v291 = vsub.f32 1.5, %v290
        %v292 = vmul.f32 %v287, %v291
        %vm293 = vweird.f32 %v286
        %vm294 = vweird.f32 %v287
        %vm295 = vmor %vm293, %vm294
        %v296 = vsel %vm295, %v287, %v292
        %s297 = vtos %v296
        %v298 = vld [vmem:[%s229] sm:$0xf]
        %v299 = vstv %s297
        %v300 = vmul.f32 %v299, %v264
        %302 = vset.pattern.permute.xlu0 0
        %303 = vperm.xlu0 %302, %v300
        %v304 = vpop.permute.xlu0 %303
        %v306 = vperm.slane %v298, 0
        %v307 = vmul.f32 %v304, %v306
        %308 = vset.pattern.permute.xlu0 1
        %309 = vperm.xlu0 %308, %v300
        %v310 = vpop.permute.xlu0 %309
        %v312 = vperm.slane %v298, 1
        %v313 = vmul.f32 %v310, %v312
        %v314 = vadd.f32 %v307, %v313
        %315 = vset.pattern.permute.xlu0 2
        %316 = vperm.xlu0 %315, %v300
        %v317 = vpop.permute.xlu0 %316
        %v319 = vperm.slane %v298, 2
        %v320 = vmul.f32 %v317, %v319
        %v321 = vadd.f32 %v314, %v320
        %322 = vset.pattern.permute.xlu0 3
        %323 = vperm.xlu0 %322, %v300
        %v324 = vpop.permute.xlu0 %323
        %v326 = vperm.slane %v298, 3
        %v327 = vmul.f32 %v324, %v326
        %v328 = vadd.f32 %v321, %v327
        %v329 = vstv %s285
        %v330 = vmul.f32 %v329, %v298
        %v331 = vadd.f32 %v330, %v328
        %v332 = vld [vmem:[%s263] sm:$0xf]
        %334 = vset.pattern.permute.xlu0 0
        %335 = vperm.xlu0 %334, %v332
        %v336 = vpop.permute.xlu0 %335
        %v338 = vadd.f32 %v331, %v336
        %339 = vst [vmem:[%s259] sm:$0xf] %v338
        %s340 = sadd.s32 %s265, 1
        %s341 = sld [smem:[#allocation2 + %s340]]
        %s342 = smul.f32 %s341, %s341
        %s343 = sadd.f32 %s342, 1.0
        %v344 = vstv %s343
        %v345 = vrcp.pop %v344
        %v346 = vmul.f32 %v344, %v345
        %v347 = vsub.f32 1.0, %v346
        %v348 = vmul.f32 %v345, %v347
        %v349 = vadd.f32 %v345, %v348
        %vm350 = vweird.f32 %v344
        %vm351 = vweird.f32 %v345
        %vm352 = vmor %vm350, %vm351
        %v353 = vsel %vm352, %v345, %v349
        %v354 = vand.u32 2147483647, %v344
        %vm355 = vcmp.eq.f32.partialorder %v354, 8.507059e+37
        %v356 = vand.u32 %v344, 2147483648
        %v357 = vor.u32 1.1754944e-38, %v356
        %v358 = vsel %vm355, %v357, %v353
        %s359 = vtos %v358
        %s360 = smul.f32 %s342, %s359
        %v361 = vstv %s343
        %v362 = vrsqrt.pop %v361
        %v363 = vmul.f32 %v362, %v361
        %v364 = vmul.f32 %v363, %v362
        %v365 = vmul.f32 0.5, %v364
        %v366 = vsub.f32 1.5, %v365
        %v367 = vmul.f32 %v362, %v366
        %vm368 = vweird.f32 %v361
        %vm369 = vweird.f32 %v362
        %vm370 = vmor %vm368, %vm369
        %v371 = vsel %vm370, %v362, %v367
        %s372 = vtos %v371
        %v373 = vld [vmem:[%s229 + $0x4] sm:$0xf]
        %v374 = vstv %s372
        %v375 = vmul.f32 %v374, %v264
        %377 = vset.pattern.permute.xlu0 0
        %378 = vperm.xlu0 %377, %v375
        %v379 = vpop.permute.xlu0 %378
        %v381 = vperm.slane %v373, 0
        %v382 = vmul.f32 %v379, %v381
        %383 = vset.pattern.permute.xlu0 1
        %384 = vperm.xlu0 %383, %v375
        %v385 = vpop.permute.xlu0 %384
        %v387 = vperm.slane %v373, 1
        %v388 = vmul.f32 %v385, %v387
        %v389 = vadd.f32 %v382, %v388
        %390 = vset.pattern.permute.xlu0 2
        %391 = vperm.xlu0 %390, %v375
        %v392 = vpop.permute.xlu0 %391
        %v394 = vperm.slane %v373, 2
        %v395 = vmul.f32 %v392, %v394
        %v396 = vadd.f32 %v389, %v395
        %397 = vset.pattern.permute.xlu0 3
        %398 = vperm.xlu0 %397, %v375
        %v399 = vpop.permute.xlu0 %398
        %v401 = vperm.slane %v373, 3
        %v402 = vmul.f32 %v399, %v401
        %v403 = vadd.f32 %v396, %v402
        %v404 = vstv %s360
        %v405 = vmul.f32 %v404, %v373
        %v406 = vadd.f32 %v405, %v403
        %v407 = vld [vmem:[%s263 + $0x4] sm:$0xf]
        %409 = vset.pattern.permute.xlu0 0
        %410 = vperm.xlu0 %409, %v407
        %v411 = vpop.permute.xlu0 %410
        %v413 = vadd.f32 %v406, %v411
        %414 = vst [vmem:[%s259 + $0x4] sm:$0xf] %v413
        %s415 = sand.u32 %s140, 1
        %s416 = scalar_lea.sflag [#allocation4], %s415
        %s417 = sand.u32 %s140, 1
        %s418 = smul.addr %s417, 8
        %s419 = scalar_lea.vmem [#allocation7], %s418
        // Predicated region
        $region45: #{tpu_custom_call.1} parent=35 // pred_check
          %p420 = pneg %p150
        $region46: #{tpu_custom_call.1} parent=35 // pred_check_branch
          %422 = sbr.rel (%p420) target = $region48
        $region47: #{tpu_custom_call.1} parent=35 // pred_region
          %424 = vsyncadd %s416, 0
          %s425 = smul.addr %s26, 2
          %s426 = sadd.s32 %s27, %s425
          %s427 = smul.addr %s426, 8
          %s428 = scalar_lea.hbm %s4, %s427
          %s430 = sshll.u32 %s419, 4
          %s431 = int_to_ptr.vmem [resolvable:$true] %s430
          %s432 = sshll.u32 %s428, 4
          %s433 = int_to_ptr.hbm [resolvable:$true] %s432
          %435 = dma.vmem_to_hbm [thread:$0]  %s431, 128, %s433, %s416
        $region48: #{tpu_custom_call.1} parent=35 // pred_fallthru
          _
      $region36: #{tpu_custom_call.1} parent=5 // pred_fallthru
        _
      %p436 = scmp.le.s32.totalorder 2, %s17
      // Predicated region
      $region49: #{tpu_custom_call.1} parent=5 // pred_check
        %p437 = pneg %p436
      $region50: #{tpu_custom_call.1} parent=5 // pred_check_branch
        %439 = sbr.rel (%p437) target = $region52
      $region51: #{tpu_custom_call.1} parent=5 // pred_region
        %s440 = ssub.s32 %s17, 2
        // Predicated region
        $region53: #{tpu_custom_call.1} parent=51 // pred_check
          %p441 = pneg %p156
        $region54: #{tpu_custom_call.1} parent=51 // pred_check_branch
          %443 = sbr.rel (%p441) target = $region56
        $region55: #{tpu_custom_call.1} parent=51 // pred_region
          %s444 = sand.u32 %s141, 1
          %s445 = scalar_lea.sflag [#allocation4], %s444
          %s446 = sand.u32 %s141, 1
          %s447 = smul.addr %s446, 8
          %s448 = scalar_lea.vmem [#allocation7], %s447
          %450 = dma.done %s445, 128
        $region56: #{tpu_custom_call.1} parent=51 // pred_fallthru
          _
      $region52: #{tpu_custom_call.1} parent=5 // pred_fallthru
        _
    $region6: #{tpu_custom_call.1} parent=1 // loop_footer
      %s21 = sadd.s32 1, %s17
    $region7: #{tpu_custom_call.1} parent=1 // loop_footer_branch
      %16 = sbr.rel target = $region3
    $region8: #{tpu_custom_call.1} parent=1 // loop_exit
      _
    %451 = vsyncpa [#allocation3], 1
    %s452 = scalar_lea.sflag [#allocation3], 1
    %453 = vsyncpa %s452, 1
    %454 = vsyncpa [#allocation4], 1
    %s455 = scalar_lea.sflag [#allocation4], 1
    %456 = vsyncpa %s455, 1
    %457 = vsyncpa [#allocation5], 1
    %s458 = scalar_lea.sflag [#allocation5], 1
    %459 = vsyncpa %s458, 1

</llo_original>
